<compile_context>
chip_gen: v7x
topology: tpu7x:2x2x1
jax: 0.10.0
libtpu: 0.0.40
codegen_flags: <defaults>
</compile_context>

<pallas_src>
import functools
import math

import jax
import jax.numpy as jnp
from jax import lax
from jax.experimental import pallas as pl
from jax.experimental.pallas import tpu as pltpu


# ----------------------------- hardware queries -----------------------------

def _vmem_limit_bytes():
    """Generation-aware scoped VMEM limit: ~half of physical per-core VMEM."""
    try:
        cap = pltpu.get_tpu_info().vmem_capacity_bytes
    except Exception:
        cap = 64 * 1024 * 1024          # conservative (v7x-sized) fallback
    # v5e/v6e: 128 MiB -> 64 MiB limit; v7x: 64 MiB -> 32 MiB limit.
    return max(32 * 1024 * 1024, min(64 * 1024 * 1024, cap // 2))


def _has_bf16_vpu():
    """bf16 VPU/EUP exist on v6e/v7x; v5e (and older) would pay convert ops."""
    try:
        kind = jax.devices()[0].device_kind.lower()
    except Exception:
        return False
    return ("v6" in kind) or ("v7" in kind)


def _choose_tile_n(n, cin, cout, x_bytes, o_bytes, vmem_limit):
    """Node-tile size: multiple of 512 (or full n), sized against the VMEM limit."""
    # Resident parameter tiles (weight + up to 3 (cout,1) vectors, lane-padded
    # to 128), x2 safety in case Pallas still double-buffers them.
    resident = 8 * cout * (max(cin, 128) + 3 * 128)
    budget = int(0.75 * vmem_limit) - resident
    # Double-buffered x + out blocks plus ~3 f32 (cout, tn) tail intermediates.
    per_node = 2 * (cin * x_bytes + cout * o_bytes) + 12 * cout
    tn = budget // max(per_node, 1)
    tn = max(512, min(8192, (tn // 512) * 512))
    return n if n <= tn else tn          # full-dim block is always legal


# --------------------------------- kernels ----------------------------------

def _conv1x1(x_ref, w_ref, b):
    """1x1 conv in NCW layout: (cout, cin) @ (cin, TN) + bias -> (cout, TN) f32.

    Always on the MXU: even with tiny cin the contraction lives in the
    otherwise-idle vex slot and is hidden by the pipeline, while the VALU slot
    (norm/scale-shift/SiLU tail) is the one that saturates.
    """
    y = lax.dot_general(
        w_ref[...], x_ref[0],
        dimension_numbers=(((1,), (0,)), ((), ())),
        preferred_element_type=jnp.float32,
    )
    return y + b


def _rmsnorm(y, g_scaled):
    """y / max(||y||_2, 1e-12) * (g * sqrt(cout)); reduce over the channel axis."""
    ss = jnp.sum(y * y, axis=0, keepdims=True)                 # (1, TN), XLU reduce
    inv = lax.rsqrt(jnp.maximum(ss, jnp.float32(1e-24)))       # == 1/max(sqrt(ss),1e-12)
    return y * inv * g_scaled


def _silu(y):
    """SiLU via EUP exp + approximate EUP reciprocal (no VALU NR refinement)."""
    one = jnp.asarray(1.0, dtype=y.dtype)
    return y * pl.reciprocal(one + jnp.exp(-y), approx=True)


def _block_kernel(x_ref, w_ref, b_ref, g_ref, o_ref, *, tail_dtype):
    b = b_ref[...].astype(jnp.float32)              # (cout, 1)
    g = g_ref[...].astype(jnp.float32)              # (cout, 1), already * sqrt(cout)
    y = _conv1x1(x_ref, w_ref, b)                   # (cout, TN) f32
    y = _rmsnorm(y, g).astype(tail_dtype)           # bf16 tail on v6e/v7x when out=bf16
    o_ref[0] = _silu(y).astype(o_ref.dtype)         # Dropout(p=0) is identity


def _block_kernel_ss(x_ref, w_ref, b_ref, geff_ref, sh_ref, o_ref, *, tail_dtype):
    b = b_ref[...].astype(jnp.float32)              # (cout, 1)
    geff = geff_ref[0].astype(jnp.float32)          # (cout, 1): g*sqrt(cout)*(scale+1)
    sh = sh_ref[0].astype(tail_dtype)               # (cout, 1) per-batch shift
    y = _conv1x1(x_ref, w_ref, b)
    y = _rmsnorm(y, geff).astype(tail_dtype) + sh   # scale already folded into geff
    o_ref[0] = _silu(y).astype(o_ref.dtype)


# --------------------------------- wrapper -----------------------------------

def block_forward(x_ncw, weight, bias, g, scale_shift=None, *, tile_n=None):
    """x_ncw: [bs, dim_in, n_node] (PyTorch NCW). Returns [bs, dim_out, n_node]."""
    bs, cin, n = x_ncw.shape
    cout = weight.shape[0]
    out_dtype = x_ncw.dtype
    tail_dtype = (jnp.bfloat16
                  if (out_dtype == jnp.bfloat16 and _has_bf16_vpu())
                  else jnp.float32)

    vmem_limit = _vmem_limit_bytes()
    if tile_n is None:
        tn = _choose_tile_n(n, cin, cout,
                            jnp.dtype(x_ncw.dtype).itemsize,
                            jnp.dtype(out_dtype).itemsize,
                            vmem_limit)
    else:
        tn = min(tile_n, n)
    n_tiles = pl.cdiv(n, tn)

    b2 = bias.astype(jnp.float32).reshape(cout, 1)
    gs = (g.astype(jnp.float32).reshape(-1) * math.sqrt(cout)).reshape(cout, 1)

    # Larger grid axis first so the v7x megacore split never lands on a size-1
    # (or odd, tiny) axis. No effect on single-TC v5e/v6e.
    if n_tiles >= bs:
        grid = (n_tiles, bs)
        xmap = lambda ni, bi: (bi, 0, ni)
        pmap = lambda ni, bi: (0, 0)
        smap = lambda ni, bi: (bi, 0, 0)
    else:
        grid = (bs, n_tiles)
        xmap = lambda bi, ni: (bi, 0, ni)
        pmap = lambda bi, ni: (0, 0)
        smap = lambda bi, ni: (bi, 0, 0)

    x_spec = pl.BlockSpec((1, cin, tn), xmap)
    out_spec = pl.BlockSpec((1, cout, tn), xmap)
    w_spec = pl.BlockSpec((cout, cin), pmap)        # resident (constant index map)
    c_spec = pl.BlockSpec((cout, 1), pmap)          # resident per-channel vectors
    ss_spec = pl.BlockSpec((1, cout, 1), smap)      # per-batch vectors

    cparams = pltpu.CompilerParams(
        dimension_semantics=("parallel", "parallel"),
        vmem_limit_bytes=vmem_limit,
    )
    out_shape = jax.ShapeDtypeStruct((bs, cout, n), out_dtype)

    if scale_shift is None:
        kern = functools.partial(_block_kernel, tail_dtype=tail_dtype)
        return pl.pallas_call(
            kern,
            out_shape=out_shape,
            grid=grid,
            in_specs=[x_spec, w_spec, c_spec, c_spec],
            out_specs=out_spec,
            compiler_params=cparams,
        )(x_ncw, weight, b2, gs)

    scale, shift = scale_shift                      # NCW-broadcastable, e.g. [bs, cout, 1]
    # Fold (scale + 1) into the per-batch gain; only the shift add stays in-kernel.
    geff = (jnp.broadcast_to(scale, (bs, cout, 1)).astype(jnp.float32) + 1.0) \
        * gs.reshape(1, cout, 1)
    sh = jnp.broadcast_to(shift, (bs, cout, 1)).astype(jnp.float32)

    kern = functools.partial(_block_kernel_ss, tail_dtype=tail_dtype)
    return pl.pallas_call(
        kern,
        out_shape=out_shape,
        grid=grid,
        in_specs=[x_spec, w_spec, c_spec, ss_spec, ss_spec],
        out_specs=out_spec,
        compiler_params=cparams,
    )(x_ncw, weight, b2, geff, sh)


# -------------------------------- reference ----------------------------------

def _reference(x_ncw, weight, bias, g, scale_shift=None):
    """Plain-JAX reference mirroring the PyTorch forward exactly."""
    y = jnp.einsum("oc,bcn->bon", weight, x_ncw) + bias[None, :, None]
    cout = weight.shape[0]
    nrm = jnp.sqrt(jnp.sum(y * y, axis=1, keepdims=True))
    y = y / jnp.maximum(nrm, 1e-12)
    y = y * g.reshape(1, cout, 1) * math.sqrt(cout)
    if scale_shift is not None:
        scale, shift = scale_shift
        y = y * (scale + 1.0) + shift
    return y * jax.nn.sigmoid(y)


if __name__ == "__main__":
    key = jax.random.PRNGKey(0)
    bs, dim_in, dim_out, n_node = 2, 4, 32, 16

    k1, k2, k3, k4, k5 = jax.random.split(key, 5)
    x = jax.random.normal(k1, (bs, dim_in, n_node), dtype=jnp.float32)
    # Deterministic parameter init (Conv1d: kaiming-uniform-like bound).
    bound = 1.0 / math.sqrt(dim_in)
    weight = jax.random.uniform(k2, (dim_out, dim_in), jnp.float32, -bound, bound)
    bias = jax.random.uniform(k3, (dim_out,), jnp.float32, -bound, bound)
    g = jnp.ones((dim_out,), dtype=jnp.float32)     # RMSNorm.g initialized to ones

    # scale_shift as used in diffusion blocks: broadcastable [bs, dim_out, 1]
    scale = 0.1 * jax.random.normal(k4, (bs, dim_out, 1), dtype=jnp.float32)
    shift = 0.1 * jax.random.normal(k5, (bs, dim_out, 1), dtype=jnp.float32)

    out1 = jax.block_until_ready(block_forward(x, weight, bias, g, None))
    out2 = jax.block_until_ready(block_forward(x, weight, bias, g, (scale, shift)))

    ref1 = _reference(x, weight, bias, g, None)
    ref2 = _reference(x, weight, bias, g, (scale, shift))

    # The SiLU uses the approximate EUP reciprocal (pl.reciprocal(approx=True)),
    # trading ~1e-3-level relative error for fewer VALU ops -> loosened tolerance.
    tol = dict(atol=1e-2, rtol=1e-2)
    assert jnp.allclose(out1, ref1, **tol)
    assert jnp.allclose(out2, ref2, **tol)

    # Exercise the multi-tile grid (n-tiles-first ordering + masked remainder tile).
    n2 = 400
    x2 = jax.random.normal(k1, (bs, dim_in, n2), dtype=jnp.float32)
    out3 = jax.block_until_ready(
        block_forward(x2, weight, bias, g, (scale, shift), tile_n=128))
    ref3 = _reference(x2, weight, bias, g, (scale, shift))
    assert jnp.allclose(out3, ref3, **tol)

    # TODO(synk): nn.Dropout with p>0 in training mode would need in-kernel PRNG;
    # the module's default p=0.0 makes it an identity here.
    print("KERNEL_OK")
</pallas_src>

<mosaic_0001>
module attributes {stable_mosaic.version = 11 : i64} {
  func.func @_block_kernel(%arg0: i32, %arg1: i32, %arg2: memref<1x4x16xf32, #tpu.memory_space<vmem>>, %arg3: memref<32x4xf32, #tpu.memory_space<vmem>>, %arg4: memref<32x1xf32, #tpu.memory_space<vmem>>, %arg5: memref<32x1xf32, #tpu.memory_space<vmem>>, %arg6: memref<1x32x16xf32, #tpu.memory_space<vmem>>) attributes {dimension_semantics = [#tpu.dimension_semantics<parallel>, #tpu.dimension_semantics<parallel>], iteration_bounds = array<i64: 2, 1>, scalar_prefetch = 0 : i64, scratch_operands = 0 : i64, tpu.core_type = #tpu.core_type<tc>, window_params = [{transform_indices = @transform_0, window_bounds = array<i64: 1, 4, 16>}, {pipeline_mode = #tpu.pipeline_mode<synchronous>, transform_indices = @transform_1, window_bounds = array<i64: 32, 4>}, {pipeline_mode = #tpu.pipeline_mode<synchronous>, transform_indices = @transform_2, window_bounds = array<i64: 32, 1>}, {pipeline_mode = #tpu.pipeline_mode<synchronous>, transform_indices = @transform_3, window_bounds = array<i64: 32, 1>}, {transform_indices = @transform_4, window_bounds = array<i64: 1, 32, 16>}]} {
    %c0 = arith.constant 0 : index
    %c0_0 = arith.constant 0 : index
    %0 = vector.load %arg4[%c0, %c0_0] : memref<32x1xf32, #tpu.memory_space<vmem>>, vector<32x1xf32>
    %c0_1 = arith.constant 0 : index
    %c0_2 = arith.constant 0 : index
    %1 = vector.load %arg5[%c0_1, %c0_2] : memref<32x1xf32, #tpu.memory_space<vmem>>, vector<32x1xf32>
    %c0_3 = arith.constant 0 : index
    %c0_4 = arith.constant 0 : index
    %2 = vector.load %arg3[%c0_3, %c0_4] : memref<32x4xf32, #tpu.memory_space<vmem>>, vector<32x4xf32>
    %c0_5 = arith.constant 0 : index
    %c0_6 = arith.constant 0 : index
    %c0_7 = arith.constant 0 : index
    %3 = vector.load %arg2[%c0_5, %c0_6, %c0_7] : memref<1x4x16xf32, #tpu.memory_space<vmem>>, vector<1x4x16xf32>
    %4 = vector.shape_cast %3 : vector<1x4x16xf32> to vector<4x16xf32>
    %cst = arith.constant dense<0.000000e+00> : vector<32x16xf32>
    %5 = tpu.matmul %2, %4, %cst {dimension_numbers = #tpu.dot_dimension_numbers<[1], [0], [0], [1], [0, 0, 1, 1], [], []>} : vector<32x4xf32>, vector<4x16xf32>, vector<32x16xf32> -> vector<32x16xf32>
    %6 = vector.broadcast %0 : vector<32x1xf32> to vector<32x16xf32>
    %7 = arith.addf %5, %6 : vector<32x16xf32>
    %8 = arith.mulf %7, %7 : vector<32x16xf32>
    %cst_8 = arith.constant dense<0.000000e+00> : vector<16xf32>
    %9 = vector.multi_reduction <add>, %8, %cst_8 [0] : vector<32x16xf32> to vector<16xf32>
    %10 = vector.shape_cast %9 : vector<16xf32> to vector<1x16xf32>
    %cst_9 = arith.constant 1.000000e-24 : f32
    %11 = vector.broadcast %cst_9 : f32 to vector<1x16xf32>
    %12 = arith.maximumf %10, %11 : vector<1x16xf32>
    %13 = math.rsqrt %12 : vector<1x16xf32>
    %14 = vector.broadcast %13 : vector<1x16xf32> to vector<32x16xf32>
    %15 = arith.mulf %7, %14 : vector<32x16xf32>
    %16 = vector.broadcast %1 : vector<32x1xf32> to vector<32x16xf32>
    %17 = arith.mulf %15, %16 : vector<32x16xf32>
    %cst_10 = arith.constant 0.000000e+00 : f32
    %18 = vector.broadcast %cst_10 : f32 to vector<32x16xf32>
    %19 = arith.subf %18, %17 : vector<32x16xf32>
    %20 = math.exp %19 : vector<32x16xf32>
    %cst_11 = arith.constant 1.000000e+00 : f32
    %21 = vector.broadcast %cst_11 : f32 to vector<32x16xf32>
    %22 = arith.addf %21, %20 : vector<32x16xf32>
    %23 = tpu.reciprocal %22 {approx = true} : vector<32x16xf32> -> vector<32x16xf32>
    %24 = arith.mulf %17, %23 : vector<32x16xf32>
    %c0_12 = arith.constant 0 : index
    %c0_13 = arith.constant 0 : index
    %c0_14 = arith.constant 0 : index
    %25 = vector.load %arg6[%c0_12, %c0_13, %c0_14] : memref<1x32x16xf32, #tpu.memory_space<vmem>>, vector<1x32x16xf32>
    %26 = vector.shape_cast %25 : vector<1x32x16xf32> to vector<32x16xf32>
    %27 = vector.shape_cast %24 : vector<32x16xf32> to vector<1x32x16xf32>
    tpu.vector_store %arg6[%c0_12, %c0_13, %c0_14], %27 {strides = array<i32>} : memref<1x32x16xf32, #tpu.memory_space<vmem>>, vector<1x32x16xf32>,
    return
  }
  func.func @transform_0(%arg0: i32, %arg1: i32) -> (i32, i32, i32) {
    %c0_i32 = arith.constant 0 : i32
    %c0_i32_0 = arith.constant 0 : i32
    return %arg0, %c0_i32, %arg1 : i32, i32, i32
  }
  func.func @transform_1(%arg0: i32, %arg1: i32) -> (i32, i32) {
    %c0_i32 = arith.constant 0 : i32
    %c0_i32_0 = arith.constant 0 : i32
    %c0_i32_1 = arith.constant 0 : i32
    return %c0_i32, %c0_i32_0 : i32, i32
  }
  func.func @transform_2(%arg0: i32, %arg1: i32) -> (i32, i32) {
    %c0_i32 = arith.constant 0 : i32
    %c0_i32_0 = arith.constant 0 : i32
    %c0_i32_1 = arith.constant 0 : i32
    return %c0_i32, %c0_i32_0 : i32, i32
  }
  func.func @transform_3(%arg0: i32, %arg1: i32) -> (i32, i32) {
    %c0_i32 = arith.constant 0 : i32
    %c0_i32_0 = arith.constant 0 : i32
    %c0_i32_1 = arith.constant 0 : i32
    return %c0_i32, %c0_i32_0 : i32, i32
  }
  func.func @transform_4(%arg0: i32, %arg1: i32) -> (i32, i32, i32) {
    %c0_i32 = arith.constant 0 : i32
    %c0_i32_0 = arith.constant 0 : i32
    return %arg0, %c0_i32, %arg1 : i32, i32, i32
  }
}

</mosaic_0001>

<llo_original>
// kernel: tpu_custom_call.1
$region0: #{tpu_custom_call.1}
  #allocation0 [shape = 'u32[]', space=smem, size = 0x4, offset = 0x4, fixed_abs, tag = 'smem constant byte address 0x4 - core index']
  #allocation1 [shape = 'u32[144,128]{1,0:T(1,128)}', space=vmem, size = 0x12000, scoped, tag = 'internal scratch']
  %s0 = inlined_call_operand.vmem [shape: f32[2,4,16], index: 0, kind: input, shape index: {}]
  %s1 = inlined_call_operand.vmem [shape: f32[32,4], index: 1, kind: input, shape index: {}]
  %s2 = inlined_call_operand.vmem [shape: f32[32,1], index: 2, kind: input, shape index: {}]
  %s3 = inlined_call_operand.vmem [shape: f32[32,1], index: 3, kind: input, shape index: {}]
  %s4 = inlined_call_operand.vmem [shape: f32[2,32,16], index: 4, kind: output, shape index: {}]
  %s5 = sld [smem:[#allocation0]]
  $region49: #{tpu_custom_call.1} parent=0
    _
  %s7 = ssub.s32 1, %s5
  %s8 = scalar_select 0, %s7, %s5
  loop: start=0, step=1, limit=4
  $region2: #{tpu_custom_call.1} parent=0 // loop_pre_header
    _
  $region3: #{tpu_custom_call.1} parent=0 // loop_header
    %s10 = sphi 0, %s14
    %p11 = scmp.ge.s32.totalorder %s10, 4
    %s17 = sphi 0, %s29
    %s18 = sphi 0, %s25
    %s19 = sphi 0, %s17
    %s20 = sphi 0, %s18
    %s21 = sphi 0, %s19
    %s22 = sphi 0, %s20
    %s34 = sphi 0, %s36
    %s37 = sphi 0, %s34
    %s38 = sphi 0, %s37
    %s54 = sphi 0, %s38
    %s58 = sphi 0, %s58
    %s60 = sphi 0, %s58
    %s61 = sphi 0, %s60
    %s75 = sphi 0, %s61
    %s79 = sphi 0, %s79
    %s81 = sphi 0, %s79
    %s82 = sphi 0, %s81
    %s96 = sphi 0, %s82
    %s100 = sphi 0, %s100
    %s102 = sphi 0, %s100
    %s103 = sphi 0, %s102
    %s117 = sphi 0, %s103
    %s125 = sphi 0, %s127
    %s128 = sphi 0, %s125
    %s129 = sphi 0, %s128
    %s145 = sphi 0, %s129
  $region4: #{tpu_custom_call.1} parent=0 // loop_header_branch
    %13 = sbr.rel (%p11) target = $region8
  $region5: #{tpu_custom_call.1} parent=0 // loop_body
    %s15 = ssub.s32 %s10, 1
    %s16 = ssub.s32 %s10, 2
    %s23 = sadd.s32 1, %s18
    %p24 = scmp.ge.s32.totalorder %s23, 1
    %s25 = scalar_select %p24, 0, %s23
    %s26 = sadd.s32 1, %s17
    %s27 = scalar_select %p24, %s26, %s17
    %p28 = scmp.ge.s32.totalorder %s27, 2
    %s29 = scalar_select %p28, 0, %s27
    %s30 = ssub.s32 %s17, %s29
    %s31 = ssub.s32 %s18, %s25
    %s32 = sor.u32 %s30, %s31
    %p33 = scmp.eq.s32.totalorder %s32, 0
    %s35 = sadd.s32 %s34, 1
    %s36 = scalar_select %p33, %s34, %s35
    %p39 = pneg %p33
    %p40 = scmp.eq.s32.totalorder %s10, 1
    %p41 = por %p39, %p40
    %p42 = scmp.ne.s32.totalorder %s34, %s37
    %p43 = scmp.eq.s32.totalorder %s10, 0
    %p44 = por %p42, %p43
    %p45 = scmp.ne.s32.totalorder %s34, %s37
    %p46 = scmp.eq.s32.totalorder %s15, 1
    %p47 = por %p45, %p46
    %p48 = scmp.ne.s32.totalorder %s37, %s38
    %p49 = scmp.eq.s32.totalorder %s15, 0
    %p50 = por %p48, %p49
    %p51 = scmp.ne.s32.totalorder %s37, %s38
    %p52 = scmp.eq.s32.totalorder %s16, 1
    %p53 = por %p51, %p52
    %p55 = scmp.ne.s32.totalorder %s38, %s54
    %p56 = scmp.eq.s32.totalorder %s16, 0
    %p57 = por %p55, %p56
    %s59 = sadd.s32 %s58, 1
    %p62 = scmp.eq.s32.totalorder %s10, 1
    %p63 = scmp.ne.s32.totalorder %s58, %s60
    %p64 = scmp.eq.s32.totalorder %s10, 0
    %p65 = por %p63, %p64
    %p66 = scmp.ne.s32.totalorder %s58, %s60
    %p67 = scmp.eq.s32.totalorder %s15, 1
    %p68 = por %p66, %p67
    %p69 = scmp.ne.s32.totalorder %s60, %s61
    %p70 = scmp.eq.s32.totalorder %s15, 0
    %p71 = por %p69, %p70
    %p72 = scmp.ne.s32.totalorder %s60, %s61
    %p73 = scmp.eq.s32.totalorder %s16, 1
    %p74 = por %p72, %p73
    %p76 = scmp.ne.s32.totalorder %s61, %s75
    %p77 = scmp.eq.s32.totalorder %s16, 0
    %p78 = por %p76, %p77
    %s80 = sadd.s32 %s79, 1
    %p83 = scmp.eq.s32.totalorder %s10, 1
    %p84 = scmp.ne.s32.totalorder %s79, %s81
    %p85 = scmp.eq.s32.totalorder %s10, 0
    %p86 = por %p84, %p85
    %p87 = scmp.ne.s32.totalorder %s79, %s81
    %p88 = scmp.eq.s32.totalorder %s15, 1
    %p89 = por %p87, %p88
    %p90 = scmp.ne.s32.totalorder %s81, %s82
    %p91 = scmp.eq.s32.totalorder %s15, 0
    %p92 = por %p90, %p91
    %p93 = scmp.ne.s32.totalorder %s81, %s82
    %p94 = scmp.eq.s32.totalorder %s16, 1
    %p95 = por %p93, %p94
    %p97 = scmp.ne.s32.totalorder %s82, %s96
    %p98 = scmp.eq.s32.totalorder %s16, 0
    %p99 = por %p97, %p98
    %s101 = sadd.s32 %s100, 1
    %p104 = scmp.eq.s32.totalorder %s10, 1
    %p105 = scmp.ne.s32.totalorder %s100, %s102
    %p106 = scmp.eq.s32.totalorder %s10, 0
    %p107 = por %p105, %p106
    %p108 = scmp.ne.s32.totalorder %s100, %s102
    %p109 = scmp.eq.s32.totalorder %s15, 1
    %p110 = por %p108, %p109
    %p111 = scmp.ne.s32.totalorder %s102, %s103
    %p112 = scmp.eq.s32.totalorder %s15, 0
    %p113 = por %p111, %p112
    %p114 = scmp.ne.s32.totalorder %s102, %s103
    %p115 = scmp.eq.s32.totalorder %s16, 1
    %p116 = por %p114, %p115
    %p118 = scmp.ne.s32.totalorder %s103, %s117
    %p119 = scmp.eq.s32.totalorder %s16, 0
    %p120 = por %p118, %p119
    %s121 = ssub.s32 %s17, %s29
    %s122 = ssub.s32 %s18, %s25
    %s123 = sor.u32 %s121, %s122
    %p124 = scmp.eq.s32.totalorder %s123, 0
    %s126 = sadd.s32 %s125, 1
    %s127 = scalar_select %p124, %s125, %s126
    %p130 = pneg %p124
    %p131 = scmp.eq.s32.totalorder %s10, 1
    %p132 = por %p130, %p131
    %p133 = scmp.ne.s32.totalorder %s125, %s128
    %p134 = scmp.eq.s32.totalorder %s10, 0
    %p135 = por %p133, %p134
    %p136 = scmp.ne.s32.totalorder %s125, %s128
    %p137 = scmp.eq.s32.totalorder %s15, 1
    %p138 = por %p136, %p137
    %p139 = scmp.ne.s32.totalorder %s128, %s129
    %p140 = scmp.eq.s32.totalorder %s15, 0
    %p141 = por %p139, %p140
    %p142 = scmp.ne.s32.totalorder %s128, %s129
    %p143 = scmp.eq.s32.totalorder %s16, 1
    %p144 = por %p142, %p143
    %p146 = scmp.ne.s32.totalorder %s129, %s145
    %p147 = scmp.eq.s32.totalorder %s16, 0
    %p148 = por %p146, %p147
    %p149 = scmp.le.s32.totalorder 1, %s10
    %p150 = scmp.lt.s32.totalorder %s10, 3
    %p151 = pnand %p149, %p150
    %p152 = pneg %p151
    // Predicated region
    $region9: #{tpu_custom_call.1} parent=5 // pred_check
      _
    $region10: #{tpu_custom_call.1} parent=5 // pred_check_branch
      %154 = sbr.rel (%p151) target = $region12
    $region11: #{tpu_custom_call.1} parent=5 // pred_region
      %s155 = ssub.s32 %s10, 1
      // Predicated region
      $region13: #{tpu_custom_call.1} parent=11 // pred_check
        %p156 = pneg %p71
      $region14: #{tpu_custom_call.1} parent=11 // pred_check_branch
        %158 = sbr.rel (%p156) target = $region16
      $region15: #{tpu_custom_call.1} parent=11 // pred_region
        _
      $region16: #{tpu_custom_call.1} parent=11 // pred_fallthru
        _
      // Predicated region
      $region17: #{tpu_custom_call.1} parent=11 // pred_check
        %p159 = pneg %p92
      $region18: #{tpu_custom_call.1} parent=11 // pred_check_branch
        %161 = sbr.rel (%p159) target = $region20
      $region19: #{tpu_custom_call.1} parent=11 // pred_region
        _
      $region20: #{tpu_custom_call.1} parent=11 // pred_fallthru
        _
      // Predicated region
      $region21: #{tpu_custom_call.1} parent=11 // pred_check
        %p162 = pneg %p113
      $region22: #{tpu_custom_call.1} parent=11 // pred_check_branch
        %164 = sbr.rel (%p162) target = $region24
      $region23: #{tpu_custom_call.1} parent=11 // pred_region
        _
      $region24: #{tpu_custom_call.1} parent=11 // pred_fallthru
        _
    $region12: #{tpu_custom_call.1} parent=5 // pred_fallthru
      _
    %p165 = scmp.lt.s32.totalorder %s10, 2
    // Predicated region
    $region25: #{tpu_custom_call.1} parent=5 // pred_check
      %p166 = pneg %p165
    $region26: #{tpu_custom_call.1} parent=5 // pred_check_branch
      %168 = sbr.rel (%p166) target = $region28
    $region27: #{tpu_custom_call.1} parent=5 // pred_region
      // Predicated region
      $region29: #{tpu_custom_call.1} parent=27 // pred_check
        %p169 = pneg %p44
      $region30: #{tpu_custom_call.1} parent=27 // pred_check_branch
        %171 = sbr.rel (%p169) target = $region32
      $region31: #{tpu_custom_call.1} parent=27 // pred_region
        %p172 = scmp.lt.s32.totalorder %s17, 1
        %s173 = scalar_select %p172, %s17, 1
        %p174 = scmp.lt.s32.totalorder %s18, 0
        %s175 = scalar_select %p174, %s18, 0
        %s176 = sadd.s32 %s175, %s173
        %s177 = smul.addr %s176, 4
        %s178 = scalar_lea.vmem %s0, %s177
      $region32: #{tpu_custom_call.1} parent=27 // pred_fallthru
        _
    $region28: #{tpu_custom_call.1} parent=5 // pred_fallthru
      _
    %p179 = scmp.le.s32.totalorder 1, %s10
    %p180 = scmp.lt.s32.totalorder %s10, 3
    %p181 = pnand %p179, %p180
    %p182 = pneg %p181
    // Predicated region
    $region33: #{tpu_custom_call.1} parent=5 // pred_check
      _
    $region34: #{tpu_custom_call.1} parent=5 // pred_check_branch
      %184 = sbr.rel (%p181) target = $region36
    $region35: #{tpu_custom_call.1} parent=5 // pred_region
      %s185 = ssub.s32 %s10, 1
      %p186 = scmp.lt.s32.totalorder %s19, 1
      %s187 = scalar_select %p186, %s19, 1
      %p188 = scmp.lt.s32.totalorder %s20, 0
      %s189 = scalar_select %p188, %s20, 0
      %s190 = sadd.s32 %s189, %s187
      %s191 = smul.addr %s190, 4
      %s192 = scalar_lea.vmem %s0, %s191
      %p193 = pneg %p50
      %p194 = pneg %p47
      %p195 = pneg %p71
      %p196 = pneg %p68
      %p197 = pneg %p92
      %p198 = pneg %p89
      %p199 = pneg %p113
      %p200 = pneg %p110
      %p201 = pneg %p141
      %p202 = pneg %p138
      %p203 = scmp.lt.s32.totalorder %s19, 1
      %s204 = scalar_select %p203, %s19, 1
      %p205 = scmp.lt.s32.totalorder %s20, 0
      %s206 = scalar_select %p205, %s20, 0
      %s207 = smul.addr %s204, 4
      %s208 = sadd.s32 %s206, %s207
      %s209 = smul.addr %s208, 8
      %s210 = scalar_lea.vmem %s4, %s209
      %p211 = scmp.lt.s32.totalorder %s19, 1
      %s212 = scalar_select %p211, %s19, 1
      %p213 = scmp.lt.s32.totalorder %s20, 0
      %s214 = scalar_select %p213, %s20, 0
      %s215 = sadd.s32 %s214, %s212
      %s216 = smul.addr %s215, 4
      %s217 = scalar_lea.vmem %s0, %s216
      %p218 = scmp.lt.s32.totalorder %s19, 1
      %s219 = scalar_select %p218, %s19, 1
      %p220 = scmp.lt.s32.totalorder %s20, 0
      %s221 = scalar_select %p220, %s20, 0
      %s222 = smul.addr %s219, 4
      %s223 = sadd.s32 %s221, %s222
      %s224 = smul.addr %s223, 8
      %s225 = scalar_lea.vmem %s4, %s224
      %v226 = vld [vmem:[%s2] sm:$0xff]
      %v227 = vld [vmem:[%s2 + $0x8] sm:$0xff]
      %v228 = vld [vmem:[%s2 + $0x10] sm:$0xff]
      %v229 = vld [vmem:[%s2 + $0x18] sm:$0xff]
      %v230 = vld [vmem:[%s3] sm:$0xff]
      %v231 = vld [vmem:[%s3 + $0x8] sm:$0xff]
      %v232 = vld [vmem:[%s3 + $0x10] sm:$0xff]
      %v233 = vld [vmem:[%s3 + $0x18] sm:$0xff]
      %v234 = vld [vmem:[%s1] sm:$0xff]
      %v235 = vld [vmem:[%s1 + $0x8] sm:$0xff]
      %v236 = vld [vmem:[%s1 + $0x10] sm:$0xff]
      %v237 = vld [vmem:[%s1 + $0x18] sm:$0xff]
      %v238 = vld [vmem:[%s217] sm:$0xf]
      %240 = vset.pattern.permute.xlu0 0
      %241 = vperm.xlu0 %240, %v226
      %v242 = vpop.permute.xlu0 %241
      %245 = vset.pattern.permute.xlu0 0
      %246 = vperm.xlu0 %245, %v227
      %v247 = vpop.permute.xlu0 %246
      %250 = vset.pattern.permute.xlu0 0
      %251 = vperm.xlu0 %250, %v228
      %v252 = vpop.permute.xlu0 %251
      %255 = vset.pattern.permute.xlu0 0
      %256 = vperm.xlu0 %255, %v229
      %v257 = vpop.permute.xlu0 %256
      %vm259 = vcmask 31744
      %v261 = vsel %vm259, %v234, 0
      %v264 = vsel %vm259, %v235, 0
      %v267 = vsel %vm259, %v236, 0
      %v270 = vsel %vm259, %v237, 0
      %vm272 = vcmask 1043456
      %v274 = vsel %vm272, %v238, 0
      %276 = vmatprep.subr.mxu0 0.0
      %277 = vmatpush1.msra.mxu0 %v274
      %278 = vmatprep.subr.mxu0 0.0
      %279 = vmatpush1.msra.mxu0 0.0
      %280 = vmatprep.subr.mxu0 0.0
      %281 = vmatpush1.msra.mxu0 0.0
      %282 = vmatprep.subr.mxu0 0.0
      %283 = vmatpush1.msra.mxu0 0.0
      %284 = vmatprep.subr.mxu0 0.0
      %285 = vmatpush1.msra.mxu0 0.0
      %286 = vmatprep.subr.mxu0 0.0
      %287 = vmatpush1.msra.mxu0 0.0
      %288 = vmatprep.subr.mxu0 0.0
      %289 = vmatpush1.msra.mxu0 0.0
      %290 = vmatprep.subr.mxu0 0.0
      %291 = vmatpush1.msra.mxu0 0.0
      %292 = vmatprep.subr.mxu0 0.0
      %293 = vmatpush1.msra.mxu0 0.0
      %294 = vmatprep.subr.mxu0 0.0
      %295 = vmatpush1.msra.mxu0 0.0
      %296 = vmatprep.subr.mxu0 0.0
      %297 = vmatpush1.msra.mxu0 0.0
      %298 = vmatprep.subr.mxu0 0.0
      %299 = vmatpush1.msra.mxu0 0.0
      %300 = vmatprep.subr.mxu0 0.0
      %301 = vmatpush1.msra.mxu0 0.0
      %302 = vmatprep.subr.mxu0 0.0
      %303 = vmatpush1.msra.mxu0 0.0
      %304 = vmatprep.subr.mxu0 0.0
      %305 = vmatpush1.msra.mxu0 0.0
      %306 = vmatprep.subr.mxu0 0.0
      %307 = vmatpush1.msra.mxu0 0.0
      %308 = vmatprep.subr.mxu0 0.0
      %309 = vmatpush1.msra.mxu0 0.0
      %310 = vmatprep.subr.mxu0 0.0
      %311 = vmatpush1.msra.mxu0 0.0
      %312 = vmatprep.subr.mxu0 0.0
      %313 = vmatpush1.msra.mxu0 0.0
      %314 = vmatprep.subr.mxu0 0.0
      %315 = vmatpush1.msra.mxu0 0.0
      %316 = vmatprep.subr.mxu0 0.0
      %317 = vmatpush1.msra.mxu0 0.0
      %318 = vmatprep.subr.mxu0 0.0
      %319 = vmatpush1.msra.mxu0 0.0
      %320 = vmatprep.subr.mxu0 0.0
      %321 = vmatpush1.msra.mxu0 0.0
      %322 = vmatprep.subr.mxu0 0.0
      %323 = vmatpush1.msra.mxu0 0.0
      %324 = vmatprep.subr.mxu0 0.0
      %325 = vmatpush1.msra.mxu0 0.0
      %326 = vmatprep.subr.mxu0 0.0
      %327 = vmatpush1.msra.mxu0 0.0
      %328 = vmatprep.subr.mxu0 0.0
      %329 = vmatpush1.msra.mxu0 0.0
      %330 = vmatprep.subr.mxu0 0.0
      %331 = vmatpush1.msra.mxu0 0.0
      %332 = vmatprep.subr.mxu0 0.0
      %333 = vmatpush1.msra.mxu0 0.0
      %334 = vmatprep.subr.mxu0 0.0
      %335 = vmatpush1.msra.mxu0 0.0
      %336 = vmatprep.subr.mxu0 0.0
      %337 = vmatpush1.msra.mxu0 0.0
      %338 = vmatprep.subr.mxu0 0.0
      %339 = vmatpush1.msra.mxu0 0.0
      %340 = vmatprep.mubr.f32.mxu0 0.0
      %341 = vmatmul.mubr.f32.gmra.mrb[0].mxu0 %v261
      %v342 = vpop.f32.mrb[0].mxu0
      %v343 = vadd.f32 %v242, %v342
      %v344 = vpop.f32.mrb[0].mxu0
      %345 = vmatprep.mubr.f32.mxu0 0.0
      %346 = vmatmul.mubr.f32.gmra.mrb[0].mxu0 %v264
      %v347 = vpop.f32.mrb[0].mxu0
      %v348 = vadd.f32 %v247, %v347
      %v349 = vpop.f32.mrb[0].mxu0
      %350 = vmatprep.mubr.f32.mxu0 0.0
      %351 = vmatmul.mubr.f32.gmra.mrb[0].mxu0 %v267
      %v352 = vpop.f32.mrb[0].mxu0
      %v353 = vadd.f32 %v252, %v352
      %v354 = vpop.f32.mrb[0].mxu0
      %355 = vmatprep.mubr.f32.mxu0 0.0
      %356 = vmatmul.mubr.f32.gmra.mrb[0].mxu0 %v270
      %v357 = vpop.f32.mrb[0].mxu0
      %v358 = vadd.f32 %v257, %v357
      %v359 = vpop.f32.mrb[0].mxu0
      %360 = vdwg.mxu0
      %v361 = vmul.f32 %v343, %v343
      %v362 = vmul.f32 %v348, %v348
      %v363 = vmul.f32 %v353, %v353
      %v364 = vmul.f32 %v358, %v358
      %vm365 = vcmask 130048
      %v366 = vsel %vm365, %v361, 0.0
      %v367 = vsel %vm365, %v362, 0.0
      %v368 = vadd.f32 %v366, %v367
      %v369 = vsel %vm365, %v363, 0.0
      %v370 = vadd.f32 %v368, %v369
      %v371 = vsel %vm365, %v364, 0.0
      %v372 = vadd.f32 %v370, %v371
      %v373 = vrot.slane %v372, 4
      %v374 = vadd.f32 %v372, %v373
      %v375 = vrot.slane %v374, 2
      %v376 = vadd.f32 %v374, %v375
      %v377 = vrot.slane %v376, 1
      %v378 = vadd.f32 %v376, %v377
      %v379 = vmax.f32 %v378, 1e-24
      %v380 = vrsqrt.pop %v379
      %v381 = vmul.f32 %v343, %v380
      %v382 = vmul.f32 %v348, %v380
      %v383 = vmul.f32 %v353, %v380
      %v384 = vmul.f32 %v358, %v380
      %386 = vset.pattern.permute.xlu0 0
      %387 = vperm.xlu0 %386, %v230
      %v388 = vpop.permute.xlu0 %387
      %391 = vset.pattern.permute.xlu0 0
      %392 = vperm.xlu0 %391, %v231
      %v393 = vpop.permute.xlu0 %392
      %396 = vset.pattern.permute.xlu0 0
      %397 = vperm.xlu0 %396, %v232
      %v398 = vpop.permute.xlu0 %397
      %401 = vset.pattern.permute.xlu0 0
      %402 = vperm.xlu0 %401, %v233
      %v403 = vpop.permute.xlu0 %402
      %v405 = vmul.f32 %v381, %v388
      %v406 = vmul.f32 %v382, %v393
      %v407 = vmul.f32 %v383, %v398
      %v408 = vmul.f32 %v384, %v403
      %v409 = vsub.f32 0.0, %v405
      %v410 = vsub.f32 0.0, %v406
      %v411 = vsub.f32 0.0, %v407
      %v412 = vsub.f32 0.0, %v408
      %v413 = vmul.f32 %v409, 1.442695
      %v414 = vpow.pop %v413
      %v415 = vmul.f32 %v410, 1.442695
      %v416 = vpow.pop %v415
      %v417 = vmul.f32 %v411, 1.442695
      %v418 = vpow.pop %v417
      %v419 = vmul.f32 %v412, 1.442695
      %v420 = vpow.pop %v419
      %v421 = vadd.f32 %v414, 1.0
      %v422 = vadd.f32 %v416, 1.0
      %v423 = vadd.f32 %v418, 1.0
      %v424 = vadd.f32 %v420, 1.0
      %v425 = vrcp.pop %v421
      %v426 = vrcp.pop %v422
      %v427 = vrcp.pop %v423
      %v428 = vrcp.pop %v424
      %v429 = vmul.f32 %v405, %v425
      %v430 = vmul.f32 %v406, %v426
      %v431 = vmul.f32 %v407, %v427
      %v432 = vmul.f32 %v408, %v428
      %433 = vst.msk [vmem:[%s225] sm:$0xff] %vm365, %v429
      %434 = vst.msk [vmem:[%s225 + $0x8] sm:$0xff] %vm365, %v430
      %435 = vst.msk [vmem:[%s225 + $0x10] sm:$0xff] %vm365, %v431
      %436 = vst.msk [vmem:[%s225 + $0x18] sm:$0xff] %vm365, %v432
      %p437 = scmp.lt.s32.totalorder %s19, 1
      %s438 = scalar_select %p437, %s19, 1
      %p439 = scmp.lt.s32.totalorder %s20, 0
      %s440 = scalar_select %p439, %s20, 0
      %s441 = smul.addr %s438, 4
      %s442 = sadd.s32 %s440, %s441
      %s443 = smul.addr %s442, 8
      %s444 = scalar_lea.vmem %s4, %s443
      // Predicated region
      $region37: #{tpu_custom_call.1} parent=35 // pred_check
        %p445 = pneg %p138
      $region38: #{tpu_custom_call.1} parent=35 // pred_check_branch
        %447 = sbr.rel (%p445) target = $region40
      $region39: #{tpu_custom_call.1} parent=35 // pred_region
        _
      $region40: #{tpu_custom_call.1} parent=35 // pred_fallthru
        _
    $region36: #{tpu_custom_call.1} parent=5 // pred_fallthru
      _
    %p448 = scmp.le.s32.totalorder 2, %s10
    // Predicated region
    $region41: #{tpu_custom_call.1} parent=5 // pred_check
      %p449 = pneg %p448
    $region42: #{tpu_custom_call.1} parent=5 // pred_check_branch
      %451 = sbr.rel (%p449) target = $region44
    $region43: #{tpu_custom_call.1} parent=5 // pred_region
      %s452 = ssub.s32 %s10, 2
      // Predicated region
      $region45: #{tpu_custom_call.1} parent=43 // pred_check
        %p453 = pneg %p144
      $region46: #{tpu_custom_call.1} parent=43 // pred_check_branch
        %455 = sbr.rel (%p453) target = $region48
      $region47: #{tpu_custom_call.1} parent=43 // pred_region
        %p456 = scmp.lt.s32.totalorder %s21, 1
        %s457 = scalar_select %p456, %s21, 1
        %p458 = scmp.lt.s32.totalorder %s22, 0
        %s459 = scalar_select %p458, %s22, 0
        %s460 = smul.addr %s457, 4
        %s461 = sadd.s32 %s459, %s460
        %s462 = smul.addr %s461, 8
        %s463 = scalar_lea.vmem %s4, %s462
      $region48: #{tpu_custom_call.1} parent=43 // pred_fallthru
        _
    $region44: #{tpu_custom_call.1} parent=5 // pred_fallthru
      _
  $region6: #{tpu_custom_call.1} parent=0 // loop_footer
    %s14 = sadd.s32 1, %s10
  $region7: #{tpu_custom_call.1} parent=0 // loop_footer_branch
    %9 = sbr.rel target = $region3
  $region8: #{tpu_custom_call.1} parent=0 // loop_exit
    _

</llo_original>
